<compile_context>
chip_gen: v5e
topology: v5e:2x2
jax: 0.10.0
libtpu: 0.0.40
codegen_flags: <defaults>
</compile_context>

<pallas_src>
import functools

import jax
import jax.numpy as jnp
from jax.experimental import pallas as pl
from jax.experimental.pallas import tpu as pltpu

_LANE = 128


def _pad_out_features(out_features: int, n_members: int, lane: int = _LANE) -> int:
    """Smallest Out_pad >= out_features with n_members * Out_pad % lane == 0."""
    out_pad = out_features
    while (n_members * out_pad) % lane != 0:
        out_pad += 1
    return out_pad


# --------------------------------------------------------------------------
# Kernel: fused ensemble MLP for one batch tile.
#   x_ref : (TILE_B, In)
#   w1_ref: (In, M*H)           fused layer-1 weights (lane axis = member*H)
#   b1_ref: (1, M*H)            f32
#   w2_ref: (M, H, Out_pad)     per-member layer-2 weights (zero-padded cols)
#   b2_ref: (1, M*Out_pad)      f32 (zero-padded)
#   o_ref : (TILE_B, M*Out_pad) lane-dense output slab
# --------------------------------------------------------------------------
def _ensemble_mlp_kernel(x_ref, w1_ref, b1_ref, w2_ref, b2_ref, o_ref, *,
                         n_members, hidden, out_pad):
    w1 = w1_ref[...]
    x = x_ref[...].astype(w1.dtype)
    # Layer 1, fused over members: (TILE_B, In) @ (In, M*H) -> (TILE_B, M*H)
    h = jnp.dot(x, w1, preferred_element_type=jnp.float32)
    h = jnp.maximum(h + b1_ref[...].astype(jnp.float32), 0.0)   # bias+ReLU in f32

    # Layer 2, per member (statically unrolled; no M^2 block-diagonal weight).
    ys = []
    for m in range(n_members):
        h_m = h[:, m * hidden:(m + 1) * hidden]                 # (TILE_B, H)
        w2_m = w2_ref[m]                                        # (H, Out_pad)
        y_m = jnp.dot(h_m.astype(w2_m.dtype), w2_m,
                      preferred_element_type=jnp.float32)       # (TILE_B, Out_pad)
        ys.append(y_m)
    y = jnp.concatenate(ys, axis=-1) + b2_ref[...].astype(jnp.float32)
    o_ref[...] = y.astype(o_ref.dtype)                          # unmasked lane-dense store


# --------------------------------------------------------------------------
# One-time parameter packing (call once, cache / close over the result).
# --------------------------------------------------------------------------
def pack_ensemble_params(w1, b1, w2, b2, param_dtype=None):
    """Pack torch-Linear-layout stacked ensemble params for the fused kernel.

    w1: (M, H, In), b1: (M, H), w2: (M, Out, H), b2: (M, Out)
    param_dtype: optional matmul-operand dtype (e.g. jnp.bfloat16).

    Returns (w1_all (In, M*H), b1_all (1, M*H) f32,
             w2_p (M, H, Out_pad), b2_p (1, M*Out_pad) f32).
    """
    M, H, In = w1.shape
    Out = w2.shape[1]
    out_pad = _pad_out_features(Out, M)
    if param_dtype is None:
        param_dtype = w1.dtype

    # Layer-1 weights concatenated along lanes: column m*H + j holds w1[m, j, :].
    w1_all = jnp.transpose(w1, (2, 0, 1)).reshape(In, M * H).astype(param_dtype)
    b1_all = b1.reshape(1, M * H).astype(jnp.float32)

    # Layer-2 weights per member, transposed to (M, H, Out) and zero-padded to Out_pad.
    w2_t = jnp.transpose(w2, (0, 2, 1))                          # (M, H, Out)
    w2_p = jnp.pad(w2_t, ((0, 0), (0, 0), (0, out_pad - Out))).astype(param_dtype)
    b2_p = jnp.pad(b2, ((0, 0), (0, out_pad - Out))).reshape(1, M * out_pad)
    b2_p = b2_p.astype(jnp.float32)

    return w1_all, b1_all, w2_p, b2_p


# --------------------------------------------------------------------------
# Forward pass using pre-packed params.
# --------------------------------------------------------------------------
def deep_ensemble_forward_packed(x, packed, n_members, out_features, *,
                                 member_first=True):
    """x: (B, In); packed from pack_ensemble_params.

    Returns (M, B, Out) if member_first (torch vmap semantics), else (B, M, Out)
    (skips the extra HBM round-trip of the transpose for layout-agnostic consumers).
    """
    w1_all, b1_all, w2_p, b2_p = packed
    B, In = x.shape
    M = n_members
    H = w1_all.shape[1] // M
    out_pad = w2_p.shape[2]

    # Batch tiling: biggest tile that comfortably fits VMEM; parallel axis so
    # v7x can shard batch tiles across its 2 TensorCores.
    tile_b = B if B <= 512 else 512
    grid = (pl.cdiv(B, tile_b),)

    def nbytes(a):
        return a.size * jnp.dtype(a.dtype).itemsize

    out_itemsize = jnp.dtype(x.dtype).itemsize
    block_bytes = (tile_b * In * jnp.dtype(x.dtype).itemsize
                   + nbytes(w1_all) + nbytes(b1_all) + nbytes(w2_p) + nbytes(b2_p)
                   + tile_b * M * out_pad * out_itemsize)
    # Headroom for double-buffering + compiler scratch, capped at v7x's 64 MiB.
    vmem_limit = int(min(max(4 * block_bytes, 8 << 20), 64 << 20))

    flops = 2 * B * In * (M * H) + 2 * B * H * M * out_pad
    bytes_accessed = (nbytes(x) + nbytes(w1_all) + nbytes(b1_all)
                      + nbytes(w2_p) + nbytes(b2_p) + B * M * out_pad * out_itemsize)

    kernel = functools.partial(_ensemble_mlp_kernel,
                               n_members=M, hidden=H, out_pad=out_pad)

    out_flat = pl.pallas_call(
        kernel,
        out_shape=jax.ShapeDtypeStruct((B, M * out_pad), x.dtype),
        grid=grid,
        in_specs=[
            pl.BlockSpec((tile_b, In), lambda i: (i, 0)),        # x: streamed over B
            pl.BlockSpec((In, M * H), lambda i: (0, 0)),         # weights: resident
            pl.BlockSpec((1, M * H), lambda i: (0, 0)),
            pl.BlockSpec((M, H, out_pad), lambda i: (0, 0, 0)),
            pl.BlockSpec((1, M * out_pad), lambda i: (0, 0)),
        ],
        out_specs=pl.BlockSpec((tile_b, M * out_pad), lambda i: (i, 0)),
        compiler_params=pltpu.CompilerParams(
            dimension_semantics=("parallel",),
            vmem_limit_bytes=vmem_limit),
        cost_estimate=pl.CostEstimate(
            flops=flops, transcendentals=0, bytes_accessed=bytes_accessed),
    )(x, w1_all, b1_all, w2_p, b2_p)

    # Un-flatten members and drop zero padding outside the kernel.
    out = out_flat.reshape(B, M, out_pad)[:, :, :out_features]   # (B, M, Out)
    if member_first:
        out = jnp.transpose(out, (1, 0, 2))                      # (M, B, Out)
    return out


def deep_ensemble_forward(x, w1, b1, w2, b2):
    """Convenience wrapper matching the original stacked-parameter signature.

    NOTE: packs parameters on every call; in real use call pack_ensemble_params
    once and reuse the result with deep_ensemble_forward_packed.
    """
    M, H, In = w1.shape
    Out = w2.shape[1]
    packed = pack_ensemble_params(w1, b1, w2, b2)
    return deep_ensemble_forward_packed(x, packed, M, Out)


# --------------------------------------------------------------------------
# Plain-JAX reference mirroring torch vmap(functional_call) semantics.
# --------------------------------------------------------------------------
def _reference_forward(x, w1, b1, w2, b2):
    def member(w1m, b1m, w2m, b2m):
        h = jnp.maximum(x @ w1m.T + b1m, 0.0)
        return h @ w2m.T + b2m
    return jax.vmap(member)(w1, b1, w2, b2)


if __name__ == "__main__":
    key = jax.random.PRNGKey(0)

    n_members = 4
    batch = 8
    in_features = 32
    hidden = 64
    out_features = 16

    kx, k1, k2, k3, k4 = jax.random.split(key, 5)
    x = jax.random.normal(kx, (batch, in_features), dtype=jnp.float32)

    # Deterministic synthetic "stacked" ensemble parameters (torch Linear layout).
    w1 = 0.1 * jax.random.normal(k1, (n_members, hidden, in_features), jnp.float32)
    b1 = 0.1 * jax.random.normal(k2, (n_members, hidden), jnp.float32)
    w2 = 0.1 * jax.random.normal(k3, (n_members, out_features, hidden), jnp.float32)
    b2 = 0.1 * jax.random.normal(k4, (n_members, out_features), jnp.float32)

    # Pack ONCE (steady-state path only consumes packed params).
    packed = pack_ensemble_params(w1, b1, w2, b2)
    packed = jax.block_until_ready(packed)

    out = deep_ensemble_forward_packed(x, packed, n_members, out_features)
    out = jax.block_until_ready(out)

    ref = _reference_forward(x, w1, b1, w2, b2)
    assert out.shape == (n_members, batch, out_features)
    assert jnp.allclose(out, ref, atol=1e-4, rtol=1e-4)

    print("KERNEL_OK")
</pallas_src>

<mosaic_0001>
module attributes {stable_mosaic.version = 11 : i64} {
  func.func @_ensemble_mlp_kernel(%arg0: i32, %arg1: memref<8x32xf32, #tpu.memory_space<vmem>>, %arg2: memref<32x256xf32, #tpu.memory_space<vmem>>, %arg3: memref<1x256xf32, #tpu.memory_space<vmem>>, %arg4: memref<4x64x32xf32, #tpu.memory_space<vmem>>, %arg5: memref<1x128xf32, #tpu.memory_space<vmem>>, %arg6: memref<8x128xf32, #tpu.memory_space<vmem>>) attributes {dimension_semantics = [#tpu.dimension_semantics<parallel>], iteration_bounds = array<i64: 1>, scalar_prefetch = 0 : i64, scratch_operands = 0 : i64, tpu.core_type = #tpu.core_type<tc>, window_params = [{transform_indices = @transform_0, window_bounds = array<i64: 8, 32>}, {pipeline_mode = #tpu.pipeline_mode<synchronous>, transform_indices = @transform_1, window_bounds = array<i64: 32, 256>}, {pipeline_mode = #tpu.pipeline_mode<synchronous>, transform_indices = @transform_2, window_bounds = array<i64: 1, 256>}, {pipeline_mode = #tpu.pipeline_mode<synchronous>, transform_indices = @transform_3, window_bounds = array<i64: 4, 64, 32>}, {pipeline_mode = #tpu.pipeline_mode<synchronous>, transform_indices = @transform_4, window_bounds = array<i64: 1, 128>}, {transform_indices = @transform_5, window_bounds = array<i64: 8, 128>}]} {
    %c0 = arith.constant 0 : index
    %c0_0 = arith.constant 0 : index
    %0 = vector.load %arg2[%c0, %c0_0] : memref<32x256xf32, #tpu.memory_space<vmem>>, vector<32x256xf32>
    %c0_1 = arith.constant 0 : index
    %c0_2 = arith.constant 0 : index
    %1 = vector.load %arg1[%c0_1, %c0_2] : memref<8x32xf32, #tpu.memory_space<vmem>>, vector<8x32xf32>
    %cst = arith.constant dense<0.000000e+00> : vector<8x256xf32>
    %2 = tpu.matmul %1, %0, %cst {dimension_numbers = #tpu.dot_dimension_numbers<[1], [0], [0], [1], [0, 0, 1, 1], [], []>} : vector<8x32xf32>, vector<32x256xf32>, vector<8x256xf32> -> vector<8x256xf32>
    %c0_3 = arith.constant 0 : index
    %c0_4 = arith.constant 0 : index
    %3 = vector.load %arg3[%c0_3, %c0_4] : memref<1x256xf32, #tpu.memory_space<vmem>>, vector<1x256xf32>
    %4 = vector.broadcast %3 : vector<1x256xf32> to vector<8x256xf32>
    %5 = arith.addf %2, %4 : vector<8x256xf32>
    %cst_5 = arith.constant 0.000000e+00 : f32
    %6 = vector.broadcast %cst_5 : f32 to vector<8x256xf32>
    %7 = arith.maximumf %5, %6 : vector<8x256xf32>
    %8 = vector.extract_strided_slice %7 {offsets = [0, 0], sizes = [8, 64], strides = [1, 1]} : vector<8x256xf32> to vector<8x64xf32>
    %c0_6 = arith.constant 0 : index
    %c0_7 = arith.constant 0 : index
    %c0_8 = arith.constant 0 : index
    %9 = vector.load %arg4[%c0_6, %c0_7, %c0_8] : memref<4x64x32xf32, #tpu.memory_space<vmem>>, vector<1x64x32xf32>
    %10 = vector.shape_cast %9 : vector<1x64x32xf32> to vector<64x32xf32>
    %cst_9 = arith.constant dense<0.000000e+00> : vector<8x32xf32>
    %11 = tpu.matmul %8, %10, %cst_9 {dimension_numbers = #tpu.dot_dimension_numbers<[1], [0], [0], [1], [0, 0, 1, 1], [], []>} : vector<8x64xf32>, vector<64x32xf32>, vector<8x32xf32> -> vector<8x32xf32>
    %12 = vector.extract_strided_slice %7 {offsets = [0, 64], sizes = [8, 64], strides = [1, 1]} : vector<8x256xf32> to vector<8x64xf32>
    %c1 = arith.constant 1 : index
    %c0_10 = arith.constant 0 : index
    %c0_11 = arith.constant 0 : index
    %13 = vector.load %arg4[%c1, %c0_10, %c0_11] : memref<4x64x32xf32, #tpu.memory_space<vmem>>, vector<1x64x32xf32>
    %14 = vector.shape_cast %13 : vector<1x64x32xf32> to vector<64x32xf32>
    %cst_12 = arith.constant dense<0.000000e+00> : vector<8x32xf32>
    %15 = tpu.matmul %12, %14, %cst_12 {dimension_numbers = #tpu.dot_dimension_numbers<[1], [0], [0], [1], [0, 0, 1, 1], [], []>} : vector<8x64xf32>, vector<64x32xf32>, vector<8x32xf32> -> vector<8x32xf32>
    %16 = vector.extract_strided_slice %7 {offsets = [0, 128], sizes = [8, 64], strides = [1, 1]} : vector<8x256xf32> to vector<8x64xf32>
    %c2 = arith.constant 2 : index
    %c0_13 = arith.constant 0 : index
    %c0_14 = arith.constant 0 : index
    %17 = vector.load %arg4[%c2, %c0_13, %c0_14] : memref<4x64x32xf32, #tpu.memory_space<vmem>>, vector<1x64x32xf32>
    %18 = vector.shape_cast %17 : vector<1x64x32xf32> to vector<64x32xf32>
    %cst_15 = arith.constant dense<0.000000e+00> : vector<8x32xf32>
    %19 = tpu.matmul %16, %18, %cst_15 {dimension_numbers = #tpu.dot_dimension_numbers<[1], [0], [0], [1], [0, 0, 1, 1], [], []>} : vector<8x64xf32>, vector<64x32xf32>, vector<8x32xf32> -> vector<8x32xf32>
    %20 = vector.extract_strided_slice %7 {offsets = [0, 192], sizes = [8, 64], strides = [1, 1]} : vector<8x256xf32> to vector<8x64xf32>
    %c3 = arith.constant 3 : index
    %c0_16 = arith.constant 0 : index
    %c0_17 = arith.constant 0 : index
    %21 = vector.load %arg4[%c3, %c0_16, %c0_17] : memref<4x64x32xf32, #tpu.memory_space<vmem>>, vector<1x64x32xf32>
    %22 = vector.shape_cast %21 : vector<1x64x32xf32> to vector<64x32xf32>
    %cst_18 = arith.constant dense<0.000000e+00> : vector<8x32xf32>
    %23 = tpu.matmul %20, %22, %cst_18 {dimension_numbers = #tpu.dot_dimension_numbers<[1], [0], [0], [1], [0, 0, 1, 1], [], []>} : vector<8x64xf32>, vector<64x32xf32>, vector<8x32xf32> -> vector<8x32xf32>
    %24 = tpu.concatenate %11, %15, %19, %23 in 1 : vector<8x32xf32>, vector<8x32xf32>, vector<8x32xf32>, vector<8x32xf32> -> vector<8x128xf32>
    %c0_19 = arith.constant 0 : index
    %c0_20 = arith.constant 0 : index
    %25 = vector.load %arg5[%c0_19, %c0_20] : memref<1x128xf32, #tpu.memory_space<vmem>>, vector<1x128xf32>
    %26 = vector.broadcast %25 : vector<1x128xf32> to vector<8x128xf32>
    %27 = arith.addf %24, %26 : vector<8x128xf32>
    %c0_21 = arith.constant 0 : index
    %c0_22 = arith.constant 0 : index
    %28 = vector.load %arg6[%c0_21, %c0_22] : memref<8x128xf32, #tpu.memory_space<vmem>>, vector<8x128xf32>
    tpu.vector_store %arg6[%c0_21, %c0_22], %27 {strides = array<i32>} : memref<8x128xf32, #tpu.memory_space<vmem>>, vector<8x128xf32>,
    return
  }
  func.func @transform_0(%arg0: i32) -> (i32, i32) {
    %c0_i32 = arith.constant 0 : i32
    %c0_i32_0 = arith.constant 0 : i32
    return %arg0, %c0_i32 : i32, i32
  }
  func.func @transform_1(%arg0: i32) -> (i32, i32) {
    %c0_i32 = arith.constant 0 : i32
    %c0_i32_0 = arith.constant 0 : i32
    %c0_i32_1 = arith.constant 0 : i32
    return %c0_i32, %c0_i32_0 : i32, i32
  }
  func.func @transform_2(%arg0: i32) -> (i32, i32) {
    %c0_i32 = arith.constant 0 : i32
    %c0_i32_0 = arith.constant 0 : i32
    %c0_i32_1 = arith.constant 0 : i32
    return %c0_i32, %c0_i32_0 : i32, i32
  }
  func.func @transform_3(%arg0: i32) -> (i32, i32, i32) {
    %c0_i32 = arith.constant 0 : i32
    %c0_i32_0 = arith.constant 0 : i32
    %c0_i32_1 = arith.constant 0 : i32
    %c0_i32_2 = arith.constant 0 : i32
    return %c0_i32, %c0_i32_0, %c0_i32_1 : i32, i32, i32
  }
  func.func @transform_4(%arg0: i32) -> (i32, i32) {
    %c0_i32 = arith.constant 0 : i32
    %c0_i32_0 = arith.constant 0 : i32
    %c0_i32_1 = arith.constant 0 : i32
    return %c0_i32, %c0_i32_0 : i32, i32
  }
  func.func @transform_5(%arg0: i32) -> (i32, i32) {
    %c0_i32 = arith.constant 0 : i32
    %c0_i32_0 = arith.constant 0 : i32
    return %arg0, %c0_i32 : i32, i32
  }
}

</mosaic_0001>

<llo_original>
// kernel: tpu_custom_call.1
$region0: #{tpu_custom_call.1}
  #allocation0 [shape = 'u32[]', space=smem, size = 0x4, offset = 0x4, fixed_abs, tag = 'smem constant byte address 0x4 - core index']
  #allocation1 [shape = 'u32[72,128]{1,0:T(1,128)}', space=vmem, size = 0x9000, scoped, tag = 'internal scratch']
  %s0 = inlined_call_operand.vmem [shape: f32[8,32], index: 0, kind: input, shape index: {}]
  %s1 = inlined_call_operand.vmem [shape: f32[32,256], index: 1, kind: input, shape index: {}]
  %s2 = inlined_call_operand.vmem [shape: f32[1,256], index: 2, kind: input, shape index: {}]
  %s3 = inlined_call_operand.vmem [shape: f32[4,64,32], index: 3, kind: input, shape index: {}]
  %s4 = inlined_call_operand.vmem [shape: f32[1,128], index: 4, kind: input, shape index: {}]
  %s5 = inlined_call_operand.hbm [shape: f32[8,128], index: 5, kind: output, shape index: {}]
  %s6 = sld [smem:[#allocation0]]
  $region30: #{tpu_custom_call.1} parent=0
    _
  %s8 = ssub.s32 1, %s6
  %s9 = scalar_select 0, %s8, %s6
  $region1: #{tpu_custom_call.1} parent=0
    #allocation2 [shape = 'u8[4096]{0}', space=vmem, size = 0x1000, scoped, tag = 'output window, operand 0, single buffered']
    #allocation3 [shape = 's32[1]{0}', space=sflag, size = 0x4, scoped, tag = 'scoped memory for tpu_custom_call.1']
    %10 = vsyncpa [#allocation3], 0
    // Predicated region
    $region2: #{tpu_custom_call.1} parent=1 // pred_check
      _
    $region3: #{tpu_custom_call.1} parent=1 // pred_check_branch
      %12 = sbr.rel (0) target = $region5
    $region4: #{tpu_custom_call.1} parent=1 // pred_region
      _
    $region5: #{tpu_custom_call.1} parent=1 // pred_fallthru
      _
    // Predicated region
    $region6: #{tpu_custom_call.1} parent=1 // pred_check
      _
    $region7: #{tpu_custom_call.1} parent=1 // pred_check_branch
      %14 = sbr.rel (0) target = $region9
    $region8: #{tpu_custom_call.1} parent=1 // pred_region
      _
    $region9: #{tpu_custom_call.1} parent=1 // pred_fallthru
      _
    // Predicated region
    $region10: #{tpu_custom_call.1} parent=1 // pred_check
      _
    $region11: #{tpu_custom_call.1} parent=1 // pred_check_branch
      %16 = sbr.rel (0) target = $region13
    $region12: #{tpu_custom_call.1} parent=1 // pred_region
      _
    $region13: #{tpu_custom_call.1} parent=1 // pred_fallthru
      _
    // Predicated region
    $region14: #{tpu_custom_call.1} parent=1 // pred_check
      _
    $region15: #{tpu_custom_call.1} parent=1 // pred_check_branch
      %18 = sbr.rel (0) target = $region17
    $region16: #{tpu_custom_call.1} parent=1 // pred_region
      _
    $region17: #{tpu_custom_call.1} parent=1 // pred_fallthru
      _
    // Predicated region
    $region18: #{tpu_custom_call.1} parent=1 // pred_check
      _
    $region19: #{tpu_custom_call.1} parent=1 // pred_check_branch
      %20 = sbr.rel (0) target = $region21
    $region20: #{tpu_custom_call.1} parent=1 // pred_region
      _
    $region21: #{tpu_custom_call.1} parent=1 // pred_fallthru
      _
    %v21 = vld [vmem:[%s1] sm:$0xff]
    %v22 = vld [vmem:[%s1 + $0x8] sm:$0xff]
    %v23 = vld [vmem:[%s1 + $0x10] sm:$0xff]
    %v24 = vld [vmem:[%s1 + $0x18] sm:$0xff]
    %v25 = vld [vmem:[%s1 + $0x20] sm:$0xff]
    %v26 = vld [vmem:[%s1 + $0x28] sm:$0xff]
    %v27 = vld [vmem:[%s1 + $0x30] sm:$0xff]
    %v28 = vld [vmem:[%s1 + $0x38] sm:$0xff]
    %v29 = vld [vmem:[%s0] sm:$0xff]
    %v30 = vld [vmem:[%s2] sm:$0x3]
    %v32 = vperm.slane %v30, 0
    %v33 = vperm.slane %v30, 1
    %vm36 = vcmask 261120
    %v38 = vsel %vm36, %v29, 0
    %40 = vmatpush.msra.mxu0 0.0
    %41 = vmatpush.msra.mxu0 0.0
    %42 = vmatpush.msra.mxu0 0.0
    %43 = vmatpush.msra.mxu0 0.0
    %44 = vmatpush.msra.mxu0 0.0
    %45 = vmatpush.msra.mxu0 0.0
    %46 = vmatpush.msra.mxu0 0.0
    %47 = vmatpush.msra.mxu0 0.0
    %48 = vmatpush.msra.mxu0 0.0
    %49 = vmatpush.msra.mxu0 0.0
    %50 = vmatpush.msra.mxu0 0.0
    %51 = vmatpush.msra.mxu0 0.0
    %52 = vmatpush.msra.mxu0 %v27
    %53 = vmatpush.msra.mxu0 %v25
    %54 = vmatpush.msra.mxu0 %v23
    %55 = vmatpush.msra.mxu0 %v21
    %56 = vmatmul.f32.gmra.mxu0 %v38
    %v57 = vpop.f32.mrf.mxu0
    %v58 = vadd.f32 %v32, %v57
    %59 = vdwg.mxu0
    %60 = vmatpush.msra.mxu0 0.0
    %61 = vmatpush.msra.mxu0 0.0
    %62 = vmatpush.msra.mxu0 0.0
    %63 = vmatpush.msra.mxu0 0.0
    %64 = vmatpush.msra.mxu0 0.0
    %65 = vmatpush.msra.mxu0 0.0
    %66 = vmatpush.msra.mxu0 0.0
    %67 = vmatpush.msra.mxu0 0.0
    %68 = vmatpush.msra.mxu0 0.0
    %69 = vmatpush.msra.mxu0 0.0
    %70 = vmatpush.msra.mxu0 0.0
    %71 = vmatpush.msra.mxu0 0.0
    %72 = vmatpush.msra.mxu0 %v28
    %73 = vmatpush.msra.mxu0 %v26
    %74 = vmatpush.msra.mxu0 %v24
    %75 = vmatpush.msra.mxu0 %v22
    %76 = vmatmul.f32.gmra.mxu0 %v38
    %v77 = vpop.f32.mrf.mxu0
    %v78 = vadd.f32 %v33, %v77
    %79 = vdwg.mxu0
    %v80 = vmax.f32 %v58, 0.0
    %v81 = vmax.f32 %v78, 0.0
    %v82 = vld [vmem:[%s3] sm:$0xff]
    %v83 = vld [vmem:[%s3 + $0x8] sm:$0xff]
    %v84 = vld [vmem:[%s3 + $0x10] sm:$0xff]
    %v85 = vld [vmem:[%s3 + $0x18] sm:$0xff]
    %v86 = vld [vmem:[%s3 + $0x20] sm:$0xff]
    %v87 = vld [vmem:[%s3 + $0x28] sm:$0xff]
    %v88 = vld [vmem:[%s3 + $0x30] sm:$0xff]
    %v89 = vld [vmem:[%s3 + $0x38] sm:$0xff]
    %vm90 = vcmask 523264
    %v92 = vsel %vm90, %v80, 0
    %94 = vmatpush.msra.mxu0 0.0
    %95 = vmatpush.msra.mxu0 0.0
    %96 = vmatpush.msra.mxu0 0.0
    %97 = vmatpush.msra.mxu0 0.0
    %98 = vmatpush.msra.mxu0 0.0
    %99 = vmatpush.msra.mxu0 0.0
    %100 = vmatpush.msra.mxu0 0.0
    %101 = vmatpush.msra.mxu0 0.0
    %102 = vmatpush.msra.mxu0 %v89
    %103 = vmatpush.msra.mxu0 %v88
    %104 = vmatpush.msra.mxu0 %v87
    %105 = vmatpush.msra.mxu0 %v86
    %106 = vmatpush.msra.mxu0 %v85
    %107 = vmatpush.msra.mxu0 %v84
    %108 = vmatpush.msra.mxu0 %v83
    %109 = vmatpush.msra.mxu0 %v82
    %110 = vmatmul.f32.gmra.mxu0 %v92
    %v111 = vpop.f32.mrf.mxu0
    %v112 = vadd.f32 0.0, %v111
    %113 = vdwg.mxu0
    %s114 = scalar_lea.vmem %s3, 64
    %v115 = vld [vmem:[%s114] sm:$0xff]
    %v116 = vld [vmem:[%s114 + $0x8] sm:$0xff]
    %v117 = vld [vmem:[%s114 + $0x10] sm:$0xff]
    %v118 = vld [vmem:[%s114 + $0x18] sm:$0xff]
    %v119 = vld [vmem:[%s114 + $0x20] sm:$0xff]
    %v120 = vld [vmem:[%s114 + $0x28] sm:$0xff]
    %v121 = vld [vmem:[%s114 + $0x30] sm:$0xff]
    %v122 = vld [vmem:[%s114 + $0x38] sm:$0xff]
    %123 = vrot.lane.b32.xlu0 %v80, 64
    %v124 = vpop.permute.xlu0 %123
    %v125 = vsel %vm90, %v124, 0
    %127 = vmatpush.msra.mxu0 0.0
    %128 = vmatpush.msra.mxu0 0.0
    %129 = vmatpush.msra.mxu0 0.0
    %130 = vmatpush.msra.mxu0 0.0
    %131 = vmatpush.msra.mxu0 0.0
    %132 = vmatpush.msra.mxu0 0.0
    %133 = vmatpush.msra.mxu0 0.0
    %134 = vmatpush.msra.mxu0 0.0
    %135 = vmatpush.msra.mxu0 %v122
    %136 = vmatpush.msra.mxu0 %v121
    %137 = vmatpush.msra.mxu0 %v120
    %138 = vmatpush.msra.mxu0 %v119
    %139 = vmatpush.msra.mxu0 %v118
    %140 = vmatpush.msra.mxu0 %v117
    %141 = vmatpush.msra.mxu0 %v116
    %142 = vmatpush.msra.mxu0 %v115
    %143 = vmatmul.f32.gmra.mxu0 %v125
    %v144 = vpop.f32.mrf.mxu0
    %v145 = vadd.f32 0.0, %v144
    %146 = vdwg.mxu0
    %s147 = scalar_lea.vmem %s3, 128
    %v148 = vld [vmem:[%s147] sm:$0xff]
    %v149 = vld [vmem:[%s147 + $0x8] sm:$0xff]
    %v150 = vld [vmem:[%s147 + $0x10] sm:$0xff]
    %v151 = vld [vmem:[%s147 + $0x18] sm:$0xff]
    %v152 = vld [vmem:[%s147 + $0x20] sm:$0xff]
    %v153 = vld [vmem:[%s147 + $0x28] sm:$0xff]
    %v154 = vld [vmem:[%s147 + $0x30] sm:$0xff]
    %v155 = vld [vmem:[%s147 + $0x38] sm:$0xff]
    %v157 = vsel %vm90, %v81, 0
    %159 = vmatpush.msra.mxu0 0.0
    %160 = vmatpush.msra.mxu0 0.0
    %161 = vmatpush.msra.mxu0 0.0
    %162 = vmatpush.msra.mxu0 0.0
    %163 = vmatpush.msra.mxu0 0.0
    %164 = vmatpush.msra.mxu0 0.0
    %165 = vmatpush.msra.mxu0 0.0
    %166 = vmatpush.msra.mxu0 0.0
    %167 = vmatpush.msra.mxu0 %v155
    %168 = vmatpush.msra.mxu0 %v154
    %169 = vmatpush.msra.mxu0 %v153
    %170 = vmatpush.msra.mxu0 %v152
    %171 = vmatpush.msra.mxu0 %v151
    %172 = vmatpush.msra.mxu0 %v150
    %173 = vmatpush.msra.mxu0 %v149
    %174 = vmatpush.msra.mxu0 %v148
    %175 = vmatmul.f32.gmra.mxu0 %v157
    %v176 = vpop.f32.mrf.mxu0
    %v177 = vadd.f32 0.0, %v176
    %178 = vdwg.mxu0
    %s179 = scalar_lea.vmem %s3, 192
    %v180 = vld [vmem:[%s179] sm:$0xff]
    %v181 = vld [vmem:[%s179 + $0x8] sm:$0xff]
    %v182 = vld [vmem:[%s179 + $0x10] sm:$0xff]
    %v183 = vld [vmem:[%s179 + $0x18] sm:$0xff]
    %v184 = vld [vmem:[%s179 + $0x20] sm:$0xff]
    %v185 = vld [vmem:[%s179 + $0x28] sm:$0xff]
    %v186 = vld [vmem:[%s179 + $0x30] sm:$0xff]
    %v187 = vld [vmem:[%s179 + $0x38] sm:$0xff]
    %188 = vrot.lane.b32.xlu0 %v81, 64
    %v189 = vpop.permute.xlu0 %188
    %v190 = vsel %vm90, %v189, 0
    %192 = vmatpush.msra.mxu0 0.0
    %193 = vmatpush.msra.mxu0 0.0
    %194 = vmatpush.msra.mxu0 0.0
    %195 = vmatpush.msra.mxu0 0.0
    %196 = vmatpush.msra.mxu0 0.0
    %197 = vmatpush.msra.mxu0 0.0
    %198 = vmatpush.msra.mxu0 0.0
    %199 = vmatpush.msra.mxu0 0.0
    %200 = vmatpush.msra.mxu0 %v187
    %201 = vmatpush.msra.mxu0 %v186
    %202 = vmatpush.msra.mxu0 %v185
    %203 = vmatpush.msra.mxu0 %v184
    %204 = vmatpush.msra.mxu0 %v183
    %205 = vmatpush.msra.mxu0 %v182
    %206 = vmatpush.msra.mxu0 %v181
    %207 = vmatpush.msra.mxu0 %v180
    %208 = vmatmul.f32.gmra.mxu0 %v190
    %v209 = vpop.f32.mrf.mxu0
    %v210 = vadd.f32 0.0, %v209
    %211 = vdwg.mxu0
    %213 = vrot.lane.b32.xlu0 %v145, 32
    %v214 = vpop.permute.xlu0 %213
    %217 = vrot.lane.b32.xlu0 %v177, 64
    %v218 = vpop.permute.xlu0 %217
    %221 = vrot.lane.b32.xlu0 %v210, 96
    %v222 = vpop.permute.xlu0 %221
    %v224 = vsel %vm36, %v112, %v214
    %v225 = vsel %vm90, %v224, %v218
    %vm226 = vcmask 785408
    %v227 = vsel %vm226, %v225, %v222
    %v228 = vld [vmem:[%s4] sm:$0x1]
    %v230 = vperm.slane %v228, 0
    %v232 = vadd.f32 %v227, %v230
    %233 = vst [vmem:[#allocation2] sm:$0xff] %v232
    // Predicated region
    $region22: #{tpu_custom_call.1} parent=1 // pred_check
      _
    $region23: #{tpu_custom_call.1} parent=1 // pred_check_branch
      %235 = sbr.rel (0) target = $region25
    $region24: #{tpu_custom_call.1} parent=1 // pred_region
      %237 = vsyncadd [#allocation3], 0
      %s239 = sshll.u32 [#allocation2], 4
      %s240 = int_to_ptr.vmem [resolvable:$true] %s239
      %s241 = sshll.u32 %s5, 4
      %s242 = int_to_ptr.hbm [resolvable:$true] %s241
      %244 = dma.vmem_to_hbm [thread:$0]  %s240, 128, %s242, [#allocation3]
    $region25: #{tpu_custom_call.1} parent=1 // pred_fallthru
      _
    // Predicated region
    $region26: #{tpu_custom_call.1} parent=1 // pred_check
      _
    $region27: #{tpu_custom_call.1} parent=1 // pred_check_branch
      %246 = sbr.rel (0) target = $region29
    $region28: #{tpu_custom_call.1} parent=1 // pred_region
      %248 = dma.done [#allocation3], 128
    $region29: #{tpu_custom_call.1} parent=1 // pred_fallthru
      _
    %249 = vsyncpa [#allocation3], 1

</llo_original>
